<compile_context>
chip_gen: v7x
topology: tpu7x:2x2x1
jax: 0.10.0
libtpu: 0.0.40
codegen_flags: <defaults>
</compile_context>

<pallas_src>
import functools

import jax
import jax.numpy as jnp
from jax import lax
from jax.experimental import pallas as pl
from jax.experimental.pallas import tpu as pltpu

_EPS = 1e-12          # torch.nn.functional.normalize default eps
_EPS_SQ = _EPS * _EPS
_N_SPLITS = 2         # leading "parallel" grid axis (one split per TC on v7x)


def _byol_kernel(qa_ref, qt_ref, za_ref, zt_ref, out_ref, acc_ref, *,
                 batch, tile_rows, inner_tiles, need_mask):
    c = pl.program_id(0)      # "parallel" split (maps to a TensorCore on v7x)
    i = pl.program_id(1)      # "arbitrary" reduction step within the split

    @pl.when(i == 0)
    def _init():
        acc_ref[0] = jnp.float32(0.0)
        acc_ref[1] = jnp.float32(0.0)
        acc_ref[2] = jnp.float32(0.0)
        acc_ref[3] = jnp.float32(0.0)

    # Upcast per tile; accumulate in f32 (inputs may be bf16 in HBM).
    qa = qa_ref[...].astype(jnp.float32)
    qt = qt_ref[...].astype(jnp.float32)
    za = za_ref[...].astype(jnp.float32)
    zt = zt_ref[...].astype(jnp.float32)

    def inv_norm(x):
        # 1 / max(||x||, eps) == rsqrt(max(||x||^2, eps^2)); per row, (TB, 1).
        sq = jnp.sum(x * x, axis=-1, keepdims=True)
        return lax.rsqrt(jnp.maximum(sq, jnp.float32(_EPS_SQ)))

    inv_qa = inv_norm(qa)
    inv_qt = inv_norm(qt)
    inv_za = inv_norm(za)
    inv_zt = inv_norm(zt)

    def rowdot(x, y):
        return jnp.sum(x * y, axis=-1, keepdims=True)

    cos_at = rowdot(qa, zt) * (inv_qa * inv_zt)
    cos_ta = rowdot(qt, za) * (inv_qt * inv_za)
    cos_aa = rowdot(qa, za) * (inv_qa * inv_za)
    cos_tt = rowdot(qt, zt) * (inv_qt * inv_zt)

    if need_mask:
        # Mask from the UNCLAMPED logical block index: drops both the padded
        # tail rows and any duplicated (clamped) block, NaN-safe via select.
        blk = c * inner_tiles + i
        row0 = blk * tile_rows
        rows = row0 + lax.broadcasted_iota(jnp.int32, (tile_rows, 1), 0)
        valid = rows < batch
        zero = jnp.float32(0.0)
        cos_at = jnp.where(valid, cos_at, zero)
        cos_ta = jnp.where(valid, cos_ta, zero)
        cos_aa = jnp.where(valid, cos_aa, zero)
        cos_tt = jnp.where(valid, cos_tt, zero)

    acc_ref[0] = acc_ref[0] + jnp.sum(cos_at)
    acc_ref[1] = acc_ref[1] + jnp.sum(cos_ta)
    acc_ref[2] = acc_ref[2] + jnp.sum(cos_aa)
    acc_ref[3] = acc_ref[3] + jnp.sum(cos_tt)

    @pl.when(i == inner_tiles - 1)
    def _finalize():
        # Scatter the 4 per-split partial sums into lanes 0..3 of sublane 0 of
        # this split's lane-dense (8, 128) output block (full unmasked vst).
        sub = lax.broadcasted_iota(jnp.int32, (8, 128), 0)
        lane = lax.broadcasted_iota(jnp.int32, (8, 128), 1)
        row0m = sub == 0
        zero = jnp.float32(0.0)
        block = (jnp.where(row0m & (lane == 0), acc_ref[0], zero)
                 + jnp.where(row0m & (lane == 1), acc_ref[1], zero)
                 + jnp.where(row0m & (lane == 2), acc_ref[2], zero)
                 + jnp.where(row0m & (lane == 3), acc_ref[3], zero))
        out_ref[0] = block


def _vmem_limit_bytes():
    """Per-generation VMEM limit: ~75% of physical, capped at 96 MiB.

    v5e/v6e (128 MiB physical) -> 96 MiB; v7x (64 MiB per TC) -> 48 MiB.
    """
    cap = 64 * 1024 * 1024        # conservative fallback (v7x per-TC VMEM)
    try:
        cap = int(pltpu.get_tpu_info().vmem_capacity_bytes)
    except Exception:
        pass
    return min((cap // 4) * 3, 96 * 1024 * 1024)


def _pick_tile_rows(batch, feat, itemsize, vmem_limit, n_splits):
    """Largest batch tile that fits the VMEM budget (no artificial row cap).

    Budget per row counts: 4 inputs x 2 pipeline buffers in HBM dtype, the 4
    materialized f32 upcast tiles when inputs are sub-32-bit, and 2 f32 tiles
    of elementwise-product headroom.  Rounding is dtype-aware (sublane pack).
    """
    per_row = 4 * 2 * feat * itemsize
    if itemsize < 4:
        per_row += 4 * feat * 4          # f32 upcast working set
    per_row += 2 * feat * 4              # product temporaries headroom
    budget = max(vmem_limit - 4 * 1024 * 1024, per_row)
    tb = budget // per_row

    pack = max(8, 32 // itemsize)        # f32 -> 8, bf16 -> 16, int8/fp8 -> 32

    # Give each "parallel" split at least one block so v7x's 2 TCs both stream.
    per_split = -(-batch // n_splits)                # ceil(batch / n_splits)
    per_split = -(-per_split // pack) * pack         # ceil to pack multiple
    tb = min(tb, per_split)

    if tb >= batch:
        return batch                     # single full-extent tile
    return max(pack, (tb // pack) * pack)


def byol_losses_pallas(q_a, q_t, z_a_ema, z_t_ema, tile_rows=None):
    """Returns (a_t_loss, t_a_loss, a_a_loss, t_t_loss) as f32 scalars."""
    B, D = q_a.shape
    itemsize = q_a.dtype.itemsize
    vmem_limit = _vmem_limit_bytes()

    if tile_rows is None:
        tile_rows = _pick_tile_rows(B, D, itemsize, vmem_limit, _N_SPLITS)
    tile_rows = min(tile_rows, B)

    total_blocks = pl.cdiv(B, tile_rows)
    n_splits = min(_N_SPLITS, total_blocks)
    inner = pl.cdiv(total_blocks, n_splits)
    need_mask = (n_splits * inner * tile_rows != B)

    def in_map(c, i):
        # Clamp the DMA to an in-bounds block; the kernel masks duplicates by
        # the unclamped logical index, so nothing is double counted.
        return (jnp.minimum(c * inner + i, total_blocks - 1), 0)

    in_spec = pl.BlockSpec((tile_rows, D), in_map)
    out_spec = pl.BlockSpec((1, 8, 128), lambda c, i: (c, 0, 0))

    kernel = functools.partial(_byol_kernel, batch=B, tile_rows=tile_rows,
                               inner_tiles=inner, need_mask=need_mask)

    cost = pl.CostEstimate(
        flops=16 * B * D,                       # 4 row-dots + 4 norm sums
        transcendentals=4 * B,                  # 4 rsqrt per row
        bytes_accessed=4 * B * D * itemsize + n_splits * 8 * 128 * 4)

    out = pl.pallas_call(
        kernel,
        out_shape=jax.ShapeDtypeStruct((n_splits, 8, 128), jnp.float32),
        grid=(n_splits, inner),
        in_specs=[in_spec, in_spec, in_spec, in_spec],
        out_specs=out_spec,
        scratch_shapes=[pltpu.SMEM((4,), jnp.float32)],
        compiler_params=pltpu.CompilerParams(
            dimension_semantics=("parallel", "arbitrary"),
            vmem_limit_bytes=vmem_limit,
        ),
        cost_estimate=cost,
    )(q_a, q_t, z_a_ema, z_t_ema)

    # Reduce the per-split partial sums and finalize: mean(2-2cos) = 2-2*sum/B.
    sums = jnp.sum(out[:, 0, :4], axis=0)
    losses = jnp.float32(2.0) - (jnp.float32(2.0) / jnp.float32(B)) * sums
    return losses[0], losses[1], losses[2], losses[3]


def byol_loss_forward(q_a, q_t, z_a_ema, z_t_ema,
                      out_key="all_loss", unimodal=True, ssl_weight=0.5,
                      tile_rows=None):
    a_t_loss, t_a_loss, a_a_loss, t_t_loss = byol_losses_pallas(
        q_a, q_t, z_a_ema, z_t_ema, tile_rows=tile_rows)

    if not unimodal:
        a_a_loss = jnp.zeros_like(a_t_loss)
        t_t_loss = jnp.zeros_like(t_a_loss)

    multimodal_loss = (a_t_loss + t_a_loss) / 2
    unimodal_loss = (a_a_loss + t_t_loss) / 2
    all_loss = ssl_weight * multimodal_loss + (1.0 - ssl_weight) * unimodal_loss

    out = {
        "a_t_loss": a_t_loss,
        "t_a_loss": t_a_loss,
        "a_a_loss": a_a_loss,
        "t_t_loss": t_t_loss,
        "all_loss": all_loss,
        "multimodal_loss": multimodal_loss,
        "unimodal_loss": unimodal_loss,
    }
    out["total_loss"] = out[out_key]
    return out


def _byol_losses_ref(q_a, q_t, z_a_ema, z_t_ema):
    """Pure-JAX reference (F.normalize-then-dot semantics)."""
    def l2norm(x):
        n = jnp.sqrt(jnp.sum(x * x, axis=-1, keepdims=True))
        return x / jnp.maximum(n, _EPS)

    def single(q, z):
        return jnp.mean(2.0 - 2.0 * jnp.sum(q * z, axis=-1))

    qa, qt, za, zt = map(lambda x: l2norm(x.astype(jnp.float32)),
                         (q_a, q_t, z_a_ema, z_t_ema))
    return (single(qa, zt), single(qt, za), single(qa, za), single(qt, zt))


if __name__ == "__main__":
    key = jax.random.PRNGKey(0)
    k1, k2, k3, k4 = jax.random.split(key, 4)

    # --- Test 1: default path (B=12, D=128 f32; auto tile -> 2 splits). ----
    B, D = 12, 128
    q_a = jax.random.normal(k1, (B, D), dtype=jnp.float32)
    q_t = jax.random.normal(k2, (B, D), dtype=jnp.float32)
    z_a_ema = jax.random.normal(k3, (B, D), dtype=jnp.float32)
    z_t_ema = jax.random.normal(k4, (B, D), dtype=jnp.float32)

    ref_at, ref_ta, ref_aa, ref_tt = _byol_losses_ref(q_a, q_t, z_a_ema, z_t_ema)
    ssl_weight = 0.5
    ref_all = (ssl_weight * (ref_at + ref_ta) / 2
               + (1 - ssl_weight) * (ref_aa + ref_tt) / 2)

    out = byol_loss_forward(q_a, q_t, z_a_ema, z_t_ema, ssl_weight=ssl_weight)
    jax.block_until_ready(out)
    assert jnp.allclose(out["a_t_loss"], ref_at, atol=1e-5, rtol=1e-5)
    assert jnp.allclose(out["t_a_loss"], ref_ta, atol=1e-5, rtol=1e-5)
    assert jnp.allclose(out["a_a_loss"], ref_aa, atol=1e-5, rtol=1e-5)
    assert jnp.allclose(out["t_t_loss"], ref_tt, atol=1e-5, rtol=1e-5)
    assert jnp.allclose(out["all_loss"], ref_all, atol=1e-5, rtol=1e-5)

    # --- Test 2: single full-extent tile (grid (1,1)). ---------------------
    a_t, t_a, a_a, t_t = byol_losses_pallas(q_a, q_t, z_a_ema, z_t_ema,
                                            tile_rows=B)
    jax.block_until_ready((a_t, t_a, a_a, t_t))
    assert jnp.allclose(a_t, ref_at, atol=1e-5, rtol=1e-5)
    assert jnp.allclose(t_a, ref_ta, atol=1e-5, rtol=1e-5)
    assert jnp.allclose(a_a, ref_aa, atol=1e-5, rtol=1e-5)
    assert jnp.allclose(t_t, ref_tt, atol=1e-5, rtol=1e-5)

    # --- Test 3: odd block count (B=40, TB=8 -> 5 blocks over 2 splits,
    #     exercises the clamped duplicate block + row masking). -------------
    B2, D2 = 40, 128
    j1, j2, j3, j4 = jax.random.split(jax.random.PRNGKey(1), 4)
    xa = jax.random.normal(j1, (B2, D2), dtype=jnp.float32)
    xt = jax.random.normal(j2, (B2, D2), dtype=jnp.float32)
    ya = jax.random.normal(j3, (B2, D2), dtype=jnp.float32)
    yt = jax.random.normal(j4, (B2, D2), dtype=jnp.float32)
    r_at, r_ta, r_aa, r_tt = _byol_losses_ref(xa, xt, ya, yt)
    p_at, p_ta, p_aa, p_tt = byol_losses_pallas(xa, xt, ya, yt, tile_rows=8)
    jax.block_until_ready((p_at, p_ta, p_aa, p_tt))
    assert jnp.allclose(p_at, r_at, atol=1e-5, rtol=1e-5)
    assert jnp.allclose(p_ta, r_ta, atol=1e-5, rtol=1e-5)
    assert jnp.allclose(p_aa, r_aa, atol=1e-5, rtol=1e-5)
    assert jnp.allclose(p_tt, r_tt, atol=1e-5, rtol=1e-5)

    # --- Test 4: bf16 inputs (dtype-aware 16-row tile rounding + f32 acc). --
    xa16, xt16, ya16, yt16 = (v.astype(jnp.bfloat16) for v in (xa, xt, ya, yt))
    r = _byol_losses_ref(xa16, xt16, ya16, yt16)
    p = byol_losses_pallas(xa16, xt16, ya16, yt16)
    jax.block_until_ready(p)
    for pv, rv in zip(p, r):
        assert jnp.allclose(pv, rv, atol=1e-4, rtol=1e-4)

    print("KERNEL_OK")
</pallas_src>

<mosaic_0001>
module attributes {stable_mosaic.version = 11 : i64} {
  func.func @_byol_kernel(%arg0: i32, %arg1: i32, %arg2: memref<8x128xf32, #tpu.memory_space<vmem>>, %arg3: memref<8x128xf32, #tpu.memory_space<vmem>>, %arg4: memref<8x128xf32, #tpu.memory_space<vmem>>, %arg5: memref<8x128xf32, #tpu.memory_space<vmem>>, %arg6: memref<1x8x128xf32, #tpu.memory_space<vmem>>, %arg7: memref<4xf32, #tpu.memory_space<smem>>) attributes {dimension_semantics = [#tpu.dimension_semantics<parallel>, #tpu.dimension_semantics<arbitrary>], iteration_bounds = array<i64: 2, 1>, scalar_prefetch = 0 : i64, scratch_operands = 1 : i64, tpu.core_type = #tpu.core_type<tc>, window_params = [{transform_indices = @transform_0, window_bounds = array<i64: 8, 128>}, {transform_indices = @transform_1, window_bounds = array<i64: 8, 128>}, {transform_indices = @transform_2, window_bounds = array<i64: 8, 128>}, {transform_indices = @transform_3, window_bounds = array<i64: 8, 128>}, {transform_indices = @transform_4, window_bounds = array<i64: 1, 8, 128>}]} {
    %c0_i32 = arith.constant 0 : i32
    %0 = arith.cmpi eq, %arg1, %c0_i32 : i32
    %1 = arith.extui %0 : i1 to i32
    %c0_i32_0 = arith.constant 0 : i32
    %2 = arith.cmpi ne, %1, %c0_i32_0 : i32
    scf.if %2 {
      %cst_34 = arith.constant 0.000000e+00 : f32
      %c0_35 = arith.constant 0 : index
      %98 = memref.load %arg7[%c0_35] : memref<4xf32, #tpu.memory_space<smem>>
      memref.store %cst_34, %arg7[%c0_35] : memref<4xf32, #tpu.memory_space<smem>>
      %cst_36 = arith.constant 0.000000e+00 : f32
      %c1_37 = arith.constant 1 : index
      %99 = memref.load %arg7[%c1_37] : memref<4xf32, #tpu.memory_space<smem>>
      memref.store %cst_36, %arg7[%c1_37] : memref<4xf32, #tpu.memory_space<smem>>
      %cst_38 = arith.constant 0.000000e+00 : f32
      %c2_39 = arith.constant 2 : index
      %100 = memref.load %arg7[%c2_39] : memref<4xf32, #tpu.memory_space<smem>>
      memref.store %cst_38, %arg7[%c2_39] : memref<4xf32, #tpu.memory_space<smem>>
      %cst_40 = arith.constant 0.000000e+00 : f32
      %c3_41 = arith.constant 3 : index
      %101 = memref.load %arg7[%c3_41] : memref<4xf32, #tpu.memory_space<smem>>
      memref.store %cst_40, %arg7[%c3_41] : memref<4xf32, #tpu.memory_space<smem>>
    } else {
    }
    %c0 = arith.constant 0 : index
    %c0_1 = arith.constant 0 : index
    %3 = vector.load %arg2[%c0, %c0_1] : memref<8x128xf32, #tpu.memory_space<vmem>>, vector<8x128xf32>
    %c0_2 = arith.constant 0 : index
    %c0_3 = arith.constant 0 : index
    %4 = vector.load %arg3[%c0_2, %c0_3] : memref<8x128xf32, #tpu.memory_space<vmem>>, vector<8x128xf32>
    %c0_4 = arith.constant 0 : index
    %c0_5 = arith.constant 0 : index
    %5 = vector.load %arg4[%c0_4, %c0_5] : memref<8x128xf32, #tpu.memory_space<vmem>>, vector<8x128xf32>
    %c0_6 = arith.constant 0 : index
    %c0_7 = arith.constant 0 : index
    %6 = vector.load %arg5[%c0_6, %c0_7] : memref<8x128xf32, #tpu.memory_space<vmem>>, vector<8x128xf32>
    %7 = arith.mulf %3, %3 : vector<8x128xf32>
    %cst = arith.constant dense<0.000000e+00> : vector<8xf32>
    %8 = vector.multi_reduction <add>, %7, %cst [1] : vector<8x128xf32> to vector<8xf32>
    %9 = vector.shape_cast %8 : vector<8xf32> to vector<8x1xf32>
    %cst_8 = arith.constant 1.000000e-24 : f32
    %10 = vector.broadcast %cst_8 : f32 to vector<8x1xf32>
    %11 = arith.maximumf %9, %10 : vector<8x1xf32>
    %12 = math.rsqrt %11 : vector<8x1xf32>
    %13 = arith.mulf %4, %4 : vector<8x128xf32>
    %cst_9 = arith.constant dense<0.000000e+00> : vector<8xf32>
    %14 = vector.multi_reduction <add>, %13, %cst_9 [1] : vector<8x128xf32> to vector<8xf32>
    %15 = vector.shape_cast %14 : vector<8xf32> to vector<8x1xf32>
    %cst_10 = arith.constant 1.000000e-24 : f32
    %16 = vector.broadcast %cst_10 : f32 to vector<8x1xf32>
    %17 = arith.maximumf %15, %16 : vector<8x1xf32>
    %18 = math.rsqrt %17 : vector<8x1xf32>
    %19 = arith.mulf %5, %5 : vector<8x128xf32>
    %cst_11 = arith.constant dense<0.000000e+00> : vector<8xf32>
    %20 = vector.multi_reduction <add>, %19, %cst_11 [1] : vector<8x128xf32> to vector<8xf32>
    %21 = vector.shape_cast %20 : vector<8xf32> to vector<8x1xf32>
    %cst_12 = arith.constant 1.000000e-24 : f32
    %22 = vector.broadcast %cst_12 : f32 to vector<8x1xf32>
    %23 = arith.maximumf %21, %22 : vector<8x1xf32>
    %24 = math.rsqrt %23 : vector<8x1xf32>
    %25 = arith.mulf %6, %6 : vector<8x128xf32>
    %cst_13 = arith.constant dense<0.000000e+00> : vector<8xf32>
    %26 = vector.multi_reduction <add>, %25, %cst_13 [1] : vector<8x128xf32> to vector<8xf32>
    %27 = vector.shape_cast %26 : vector<8xf32> to vector<8x1xf32>
    %cst_14 = arith.constant 1.000000e-24 : f32
    %28 = vector.broadcast %cst_14 : f32 to vector<8x1xf32>
    %29 = arith.maximumf %27, %28 : vector<8x1xf32>
    %30 = math.rsqrt %29 : vector<8x1xf32>
    %31 = arith.mulf %3, %6 : vector<8x128xf32>
    %cst_15 = arith.constant dense<0.000000e+00> : vector<8xf32>
    %32 = vector.multi_reduction <add>, %31, %cst_15 [1] : vector<8x128xf32> to vector<8xf32>
    %33 = vector.shape_cast %32 : vector<8xf32> to vector<8x1xf32>
    %34 = arith.mulf %12, %30 : vector<8x1xf32>
    %35 = arith.mulf %33, %34 : vector<8x1xf32>
    %36 = arith.mulf %4, %5 : vector<8x128xf32>
    %cst_16 = arith.constant dense<0.000000e+00> : vector<8xf32>
    %37 = vector.multi_reduction <add>, %36, %cst_16 [1] : vector<8x128xf32> to vector<8xf32>
    %38 = vector.shape_cast %37 : vector<8xf32> to vector<8x1xf32>
    %39 = arith.mulf %18, %24 : vector<8x1xf32>
    %40 = arith.mulf %38, %39 : vector<8x1xf32>
    %41 = arith.mulf %3, %5 : vector<8x128xf32>
    %cst_17 = arith.constant dense<0.000000e+00> : vector<8xf32>
    %42 = vector.multi_reduction <add>, %41, %cst_17 [1] : vector<8x128xf32> to vector<8xf32>
    %43 = vector.shape_cast %42 : vector<8xf32> to vector<8x1xf32>
    %44 = arith.mulf %12, %24 : vector<8x1xf32>
    %45 = arith.mulf %43, %44 : vector<8x1xf32>
    %46 = arith.mulf %4, %6 : vector<8x128xf32>
    %cst_18 = arith.constant dense<0.000000e+00> : vector<8xf32>
    %47 = vector.multi_reduction <add>, %46, %cst_18 [1] : vector<8x128xf32> to vector<8xf32>
    %48 = vector.shape_cast %47 : vector<8xf32> to vector<8x1xf32>
    %49 = arith.mulf %18, %30 : vector<8x1xf32>
    %50 = arith.mulf %48, %49 : vector<8x1xf32>
    %c1_i32 = arith.constant 1 : i32
    %51 = arith.muli %arg0, %c1_i32 : i32
    %52 = arith.addi %51, %arg1 : i32
    %c8_i32 = arith.constant 8 : i32
    %53 = arith.muli %52, %c8_i32 : i32
    %54 = tpu.iota {dimensions = array<i32: 0>} : vector<8x1xi32>
    %55 = vector.broadcast %53 : i32 to vector<8x1xi32>
    %56 = arith.addi %55, %54 : vector<8x1xi32>
    %c12_i32 = arith.constant 12 : i32
    %57 = vector.broadcast %c12_i32 : i32 to vector<8x1xi32>
    %58 = arith.cmpi slt, %56, %57 : vector<8x1xi32>
    %cst_19 = arith.constant 0.000000e+00 : f32
    %59 = vector.broadcast %cst_19 : f32 to vector<8x1xf32>
    %60 = arith.select %58, %35, %59 : vector<8x1xi1>, vector<8x1xf32>
    %cst_20 = arith.constant 0.000000e+00 : f32
    %61 = vector.broadcast %cst_20 : f32 to vector<8x1xf32>
    %62 = arith.select %58, %40, %61 : vector<8x1xi1>, vector<8x1xf32>
    %cst_21 = arith.constant 0.000000e+00 : f32
    %63 = vector.broadcast %cst_21 : f32 to vector<8x1xf32>
    %64 = arith.select %58, %45, %63 : vector<8x1xi1>, vector<8x1xf32>
    %cst_22 = arith.constant 0.000000e+00 : f32
    %65 = vector.broadcast %cst_22 : f32 to vector<8x1xf32>
    %66 = arith.select %58, %50, %65 : vector<8x1xi1>, vector<8x1xf32>
    %c0_23 = arith.constant 0 : index
    %67 = memref.load %arg7[%c0_23] : memref<4xf32, #tpu.memory_space<smem>>
    %68 = vector.shape_cast %60 : vector<8x1xf32> to vector<1x8x1xf32>
    %cst_24 = arith.constant dense<0.000000e+00> : vector<1xf32>
    %69 = vector.multi_reduction <add>, %68, %cst_24 [1, 2] : vector<1x8x1xf32> to vector<1xf32>
    %70 = vector.shape_cast %69 : vector<1xf32> to vector<1x1x1xf32>
    %71 = vector.extract %70[0, 0, 0] : f32 from vector<1x1x1xf32>
    %72 = arith.addf %67, %71 : f32
    %c0_25 = arith.constant 0 : index
    %73 = memref.load %arg7[%c0_25] : memref<4xf32, #tpu.memory_space<smem>>
    memref.store %72, %arg7[%c0_25] : memref<4xf32, #tpu.memory_space<smem>>
    %c1 = arith.constant 1 : index
    %74 = memref.load %arg7[%c1] : memref<4xf32, #tpu.memory_space<smem>>
    %75 = vector.shape_cast %62 : vector<8x1xf32> to vector<1x8x1xf32>
    %cst_26 = arith.constant dense<0.000000e+00> : vector<1xf32>
    %76 = vector.multi_reduction <add>, %75, %cst_26 [1, 2] : vector<1x8x1xf32> to vector<1xf32>
    %77 = vector.shape_cast %76 : vector<1xf32> to vector<1x1x1xf32>
    %78 = vector.extract %77[0, 0, 0] : f32 from vector<1x1x1xf32>
    %79 = arith.addf %74, %78 : f32
    %c1_27 = arith.constant 1 : index
    %80 = memref.load %arg7[%c1_27] : memref<4xf32, #tpu.memory_space<smem>>
    memref.store %79, %arg7[%c1_27] : memref<4xf32, #tpu.memory_space<smem>>
    %c2 = arith.constant 2 : index
    %81 = memref.load %arg7[%c2] : memref<4xf32, #tpu.memory_space<smem>>
    %82 = vector.shape_cast %64 : vector<8x1xf32> to vector<1x8x1xf32>
    %cst_28 = arith.constant dense<0.000000e+00> : vector<1xf32>
    %83 = vector.multi_reduction <add>, %82, %cst_28 [1, 2] : vector<1x8x1xf32> to vector<1xf32>
    %84 = vector.shape_cast %83 : vector<1xf32> to vector<1x1x1xf32>
    %85 = vector.extract %84[0, 0, 0] : f32 from vector<1x1x1xf32>
    %86 = arith.addf %81, %85 : f32
    %c2_29 = arith.constant 2 : index
    %87 = memref.load %arg7[%c2_29] : memref<4xf32, #tpu.memory_space<smem>>
    memref.store %86, %arg7[%c2_29] : memref<4xf32, #tpu.memory_space<smem>>
    %c3 = arith.constant 3 : index
    %88 = memref.load %arg7[%c3] : memref<4xf32, #tpu.memory_space<smem>>
    %89 = vector.shape_cast %66 : vector<8x1xf32> to vector<1x8x1xf32>
    %cst_30 = arith.constant dense<0.000000e+00> : vector<1xf32>
    %90 = vector.multi_reduction <add>, %89, %cst_30 [1, 2] : vector<1x8x1xf32> to vector<1xf32>
    %91 = vector.shape_cast %90 : vector<1xf32> to vector<1x1x1xf32>
    %92 = vector.extract %91[0, 0, 0] : f32 from vector<1x1x1xf32>
    %93 = arith.addf %88, %92 : f32
    %c3_31 = arith.constant 3 : index
    %94 = memref.load %arg7[%c3_31] : memref<4xf32, #tpu.memory_space<smem>>
    memref.store %93, %arg7[%c3_31] : memref<4xf32, #tpu.memory_space<smem>>
    %c0_i32_32 = arith.constant 0 : i32
    %95 = arith.cmpi eq, %arg1, %c0_i32_32 : i32
    %96 = arith.extui %95 : i1 to i32
    %c0_i32_33 = arith.constant 0 : i32
    %97 = arith.cmpi ne, %96, %c0_i32_33 : i32
    scf.if %97 {
      %98 = tpu.iota {dimensions = array<i32: 0>} : vector<8x128xi32>
      %99 = tpu.iota {dimensions = array<i32: 1>} : vector<8x128xi32>
      %c0_i32_34 = arith.constant 0 : i32
      %100 = vector.broadcast %c0_i32_34 : i32 to vector<8x128xi32>
      %101 = arith.cmpi eq, %98, %100 : vector<8x128xi32>
      %c0_i32_35 = arith.constant 0 : i32
      %102 = vector.broadcast %c0_i32_35 : i32 to vector<8x128xi32>
      %103 = arith.cmpi eq, %99, %102 : vector<8x128xi32>
      %104 = arith.andi %101, %103 : vector<8x128xi1>
      %c0_36 = arith.constant 0 : index
      %105 = memref.load %arg7[%c0_36] : memref<4xf32, #tpu.memory_space<smem>>
      %cst_37 = arith.constant 0.000000e+00 : f32
      %106 = vector.broadcast %105 : f32 to vector<8x128xf32>
      %107 = vector.broadcast %cst_37 : f32 to vector<8x128xf32>
      %108 = arith.select %104, %106, %107 : vector<8x128xi1>, vector<8x128xf32>
      %c1_i32_38 = arith.constant 1 : i32
      %109 = vector.broadcast %c1_i32_38 : i32 to vector<8x128xi32>
      %110 = arith.cmpi eq, %99, %109 : vector<8x128xi32>
      %111 = arith.andi %101, %110 : vector<8x128xi1>
      %c1_39 = arith.constant 1 : index
      %112 = memref.load %arg7[%c1_39] : memref<4xf32, #tpu.memory_space<smem>>
      %cst_40 = arith.constant 0.000000e+00 : f32
      %113 = vector.broadcast %112 : f32 to vector<8x128xf32>
      %114 = vector.broadcast %cst_40 : f32 to vector<8x128xf32>
      %115 = arith.select %111, %113, %114 : vector<8x128xi1>, vector<8x128xf32>
      %116 = arith.addf %108, %115 : vector<8x128xf32>
      %c2_i32 = arith.constant 2 : i32
      %117 = vector.broadcast %c2_i32 : i32 to vector<8x128xi32>
      %118 = arith.cmpi eq, %99, %117 : vector<8x128xi32>
      %119 = arith.andi %101, %118 : vector<8x128xi1>
      %c2_41 = arith.constant 2 : index
      %120 = memref.load %arg7[%c2_41] : memref<4xf32, #tpu.memory_space<smem>>
      %cst_42 = arith.constant 0.000000e+00 : f32
      %121 = vector.broadcast %120 : f32 to vector<8x128xf32>
      %122 = vector.broadcast %cst_42 : f32 to vector<8x128xf32>
      %123 = arith.select %119, %121, %122 : vector<8x128xi1>, vector<8x128xf32>
      %124 = arith.addf %116, %123 : vector<8x128xf32>
      %c3_i32 = arith.constant 3 : i32
      %125 = vector.broadcast %c3_i32 : i32 to vector<8x128xi32>
      %126 = arith.cmpi eq, %99, %125 : vector<8x128xi32>
      %127 = arith.andi %101, %126 : vector<8x128xi1>
      %c3_43 = arith.constant 3 : index
      %128 = memref.load %arg7[%c3_43] : memref<4xf32, #tpu.memory_space<smem>>
      %cst_44 = arith.constant 0.000000e+00 : f32
      %129 = vector.broadcast %128 : f32 to vector<8x128xf32>
      %130 = vector.broadcast %cst_44 : f32 to vector<8x128xf32>
      %131 = arith.select %127, %129, %130 : vector<8x128xi1>, vector<8x128xf32>
      %132 = arith.addf %124, %131 : vector<8x128xf32>
      %c0_45 = arith.constant 0 : index
      %c0_46 = arith.constant 0 : index
      %c0_47 = arith.constant 0 : index
      %133 = vector.load %arg6[%c0_45, %c0_46, %c0_47] : memref<1x8x128xf32, #tpu.memory_space<vmem>>, vector<1x8x128xf32>
      %134 = vector.shape_cast %133 : vector<1x8x128xf32> to vector<8x128xf32>
      %135 = vector.shape_cast %132 : vector<8x128xf32> to vector<1x8x128xf32>
      tpu.vector_store %arg6[%c0_45, %c0_46, %c0_47], %135 {strides = array<i32>} : memref<1x8x128xf32, #tpu.memory_space<vmem>>, vector<1x8x128xf32>,
    } else {
    }
    return
  }
  func.func @transform_0(%arg0: i32, %arg1: i32) -> (i32, i32) {
    %c1_i32 = arith.constant 1 : i32
    %0 = arith.muli %arg0, %c1_i32 : i32
    %1 = arith.addi %0, %arg1 : i32
    %c1_i32_0 = arith.constant 1 : i32
    %2 = arith.minsi %1, %c1_i32_0 : i32
    %c0_i32 = arith.constant 0 : i32
    %c0_i32_1 = arith.constant 0 : i32
    return %2, %c0_i32 : i32, i32
  }
  func.func @transform_1(%arg0: i32, %arg1: i32) -> (i32, i32) {
    %c1_i32 = arith.constant 1 : i32
    %0 = arith.muli %arg0, %c1_i32 : i32
    %1 = arith.addi %0, %arg1 : i32
    %c1_i32_0 = arith.constant 1 : i32
    %2 = arith.minsi %1, %c1_i32_0 : i32
    %c0_i32 = arith.constant 0 : i32
    %c0_i32_1 = arith.constant 0 : i32
    return %2, %c0_i32 : i32, i32
  }
  func.func @transform_2(%arg0: i32, %arg1: i32) -> (i32, i32) {
    %c1_i32 = arith.constant 1 : i32
    %0 = arith.muli %arg0, %c1_i32 : i32
    %1 = arith.addi %0, %arg1 : i32
    %c1_i32_0 = arith.constant 1 : i32
    %2 = arith.minsi %1, %c1_i32_0 : i32
    %c0_i32 = arith.constant 0 : i32
    %c0_i32_1 = arith.constant 0 : i32
    return %2, %c0_i32 : i32, i32
  }
  func.func @transform_3(%arg0: i32, %arg1: i32) -> (i32, i32) {
    %c1_i32 = arith.constant 1 : i32
    %0 = arith.muli %arg0, %c1_i32 : i32
    %1 = arith.addi %0, %arg1 : i32
    %c1_i32_0 = arith.constant 1 : i32
    %2 = arith.minsi %1, %c1_i32_0 : i32
    %c0_i32 = arith.constant 0 : i32
    %c0_i32_1 = arith.constant 0 : i32
    return %2, %c0_i32 : i32, i32
  }
  func.func @transform_4(%arg0: i32, %arg1: i32) -> (i32, i32, i32) {
    %c0_i32 = arith.constant 0 : i32
    %c0_i32_0 = arith.constant 0 : i32
    %c0_i32_1 = arith.constant 0 : i32
    return %arg0, %c0_i32, %c0_i32_0 : i32, i32, i32
  }
}

</mosaic_0001>

<llo_original>
// kernel: tpu_custom_call.1
$region0: #{tpu_custom_call.1}
  #allocation0 [shape = 'u32[]', space=smem, size = 0x4, offset = 0x4, fixed_abs, tag = 'smem constant byte address 0x4 - core index']
  #allocation1 [shape = 'u32[144,128]{1,0:T(1,128)}', space=vmem, size = 0x12000, scoped, tag = 'internal scratch']
  #allocation2 [shape = 'f32[4]{0:T(128)}', space=smem, size = 0x200, scoped, tag = 'scratch operand']
  %s0 = inlined_call_operand.hbm [shape: f32[12,128], index: 0, kind: input, shape index: {}]
  %s1 = inlined_call_operand.hbm [shape: f32[12,128], index: 1, kind: input, shape index: {}]
  %s2 = inlined_call_operand.hbm [shape: f32[12,128], index: 2, kind: input, shape index: {}]
  %s3 = inlined_call_operand.hbm [shape: f32[12,128], index: 3, kind: input, shape index: {}]
  %s4 = inlined_call_operand.hbm [shape: f32[2,8,128], index: 4, kind: output, shape index: {}]
  %s5 = sld [smem:[#allocation0]]
  $region73: #{tpu_custom_call.1} parent=0
    _
  %s7 = ssub.s32 1, %s5
  %s8 = scalar_select 0, %s7, %s5
  $region1: #{tpu_custom_call.1} parent=0
    #allocation3 [shape = 'u8[8192]{0}', space=vmem, size = 0x2000, scoped, tag = 'input window, operand 0']
    #allocation4 [shape = 's32[2]{0}', space=sflag, size = 0x8, scoped, tag = 'scoped memory for tpu_custom_call.1']
    #allocation5 [shape = 's32[2]{0}', space=sflag, size = 0x8, scoped, tag = 'scoped memory for tpu_custom_call.1']
    #allocation6 [shape = 'u8[8192]{0}', space=vmem, size = 0x2000, scoped, tag = 'input window, operand 1']
    #allocation7 [shape = 's32[2]{0}', space=sflag, size = 0x8, scoped, tag = 'scoped memory for tpu_custom_call.1']
    #allocation8 [shape = 'u8[8192]{0}', space=vmem, size = 0x2000, scoped, tag = 'input window, operand 2']
    #allocation9 [shape = 'u8[8192]{0}', space=vmem, size = 0x2000, scoped, tag = 'input window, operand 3']
    #allocation10 [shape = 's32[2]{0}', space=sflag, size = 0x8, scoped, tag = 'scoped memory for tpu_custom_call.1']
    #allocation11 [shape = 'u8[8192]{0}', space=vmem, size = 0x2000, scoped, tag = 'output window, operand 0']
    %9 = vsyncpa [#allocation4], 0
    %s10 = scalar_lea.sflag [#allocation4], 1
    %11 = vsyncpa %s10, 0
    %12 = vsyncpa [#allocation7], 0
    %s13 = scalar_lea.sflag [#allocation7], 1
    %14 = vsyncpa %s13, 0
    %15 = vsyncpa [#allocation10], 0
    %s16 = scalar_lea.sflag [#allocation10], 1
    %17 = vsyncpa %s16, 0
    %18 = vsyncpa [#allocation5], 0
    %s19 = scalar_lea.sflag [#allocation5], 1
    %20 = vsyncpa %s19, 0
    loop: start=0, step=1, limit=4
    $region2: #{tpu_custom_call.1} parent=1 // loop_pre_header
      _
    $region3: #{tpu_custom_call.1} parent=1 // loop_header
      %s22 = sphi 0, %s26
      %p23 = scmp.ge.s32.totalorder %s22, 4
      %s29 = sphi 0, %s41
      %s30 = sphi 0, %s37
      %s31 = sphi 0, %s29
      %s32 = sphi 0, %s30
      %s33 = sphi 0, %s31
      %s34 = sphi 0, %s32
      %s50 = sphi 0, %s52
      %s53 = sphi 0, %s50
      %s54 = sphi 0, %s53
      %s70 = sphi 0, %s54
      %s82 = sphi 0, %s84
      %s85 = sphi 0, %s82
      %s86 = sphi 0, %s85
      %s102 = sphi 0, %s86
      %s114 = sphi 0, %s116
      %s117 = sphi 0, %s114
      %s118 = sphi 0, %s117
      %s134 = sphi 0, %s118
      %s146 = sphi 0, %s148
      %s149 = sphi 0, %s146
      %s150 = sphi 0, %s149
      %s166 = sphi 0, %s150
      %s172 = sphi 0, %s174
      %s175 = sphi 0, %s172
      %s176 = sphi 0, %s175
      %s192 = sphi 0, %s176
    $region4: #{tpu_custom_call.1} parent=1 // loop_header_branch
      %25 = sbr.rel (%p23) target = $region8
    $region5: #{tpu_custom_call.1} parent=1 // loop_body
      %s27 = ssub.s32 %s22, 1
      %s28 = ssub.s32 %s22, 2
      %s35 = sadd.s32 1, %s30
      %p36 = scmp.ge.s32.totalorder %s35, 1
      %s37 = scalar_select %p36, 0, %s35
      %s38 = sadd.s32 1, %s29
      %s39 = scalar_select %p36, %s38, %s29
      %p40 = scmp.ge.s32.totalorder %s39, 2
      %s41 = scalar_select %p40, 0, %s39
      %s42 = sadd.s32 %s29, %s30
      %p43 = scmp.lt.s32.totalorder %s42, 1
      %s44 = scalar_select %p43, %s42, 1
      %s45 = sadd.s32 %s41, %s37
      %p46 = scmp.lt.s32.totalorder %s45, 1
      %s47 = scalar_select %p46, %s45, 1
      %s48 = ssub.s32 %s44, %s47
      %p49 = scmp.eq.s32.totalorder %s48, 0
      %s51 = sadd.s32 %s50, 1
      %s52 = scalar_select %p49, %s50, %s51
      %p55 = pneg %p49
      %p56 = scmp.eq.s32.totalorder %s22, 1
      %p57 = por %p55, %p56
      %p58 = scmp.ne.s32.totalorder %s50, %s53
      %p59 = scmp.eq.s32.totalorder %s22, 0
      %p60 = por %p58, %p59
      %p61 = scmp.ne.s32.totalorder %s50, %s53
      %p62 = scmp.eq.s32.totalorder %s27, 1
      %p63 = por %p61, %p62
      %p64 = scmp.ne.s32.totalorder %s53, %s54
      %p65 = scmp.eq.s32.totalorder %s27, 0
      %p66 = por %p64, %p65
      %p67 = scmp.ne.s32.totalorder %s53, %s54
      %p68 = scmp.eq.s32.totalorder %s28, 1
      %p69 = por %p67, %p68
      %p71 = scmp.ne.s32.totalorder %s54, %s70
      %p72 = scmp.eq.s32.totalorder %s28, 0
      %p73 = por %p71, %p72
      %s74 = sadd.s32 %s29, %s30
      %p75 = scmp.lt.s32.totalorder %s74, 1
      %s76 = scalar_select %p75, %s74, 1
      %s77 = sadd.s32 %s41, %s37
      %p78 = scmp.lt.s32.totalorder %s77, 1
      %s79 = scalar_select %p78, %s77, 1
      %s80 = ssub.s32 %s76, %s79
      %p81 = scmp.eq.s32.totalorder %s80, 0
      %s83 = sadd.s32 %s82, 1
      %s84 = scalar_select %p81, %s82, %s83
      %p87 = pneg %p81
      %p88 = scmp.eq.s32.totalorder %s22, 1
      %p89 = por %p87, %p88
      %p90 = scmp.ne.s32.totalorder %s82, %s85
      %p91 = scmp.eq.s32.totalorder %s22, 0
      %p92 = por %p90, %p91
      %p93 = scmp.ne.s32.totalorder %s82, %s85
      %p94 = scmp.eq.s32.totalorder %s27, 1
      %p95 = por %p93, %p94
      %p96 = scmp.ne.s32.totalorder %s85, %s86
      %p97 = scmp.eq.s32.totalorder %s27, 0
      %p98 = por %p96, %p97
      %p99 = scmp.ne.s32.totalorder %s85, %s86
      %p100 = scmp.eq.s32.totalorder %s28, 1
      %p101 = por %p99, %p100
      %p103 = scmp.ne.s32.totalorder %s86, %s102
      %p104 = scmp.eq.s32.totalorder %s28, 0
      %p105 = por %p103, %p104
      %s106 = sadd.s32 %s29, %s30
      %p107 = scmp.lt.s32.totalorder %s106, 1
      %s108 = scalar_select %p107, %s106, 1
      %s109 = sadd.s32 %s41, %s37
      %p110 = scmp.lt.s32.totalorder %s109, 1
      %s111 = scalar_select %p110, %s109, 1
      %s112 = ssub.s32 %s108, %s111
      %p113 = scmp.eq.s32.totalorder %s112, 0
      %s115 = sadd.s32 %s114, 1
      %s116 = scalar_select %p113, %s114, %s115
      %p119 = pneg %p113
      %p120 = scmp.eq.s32.totalorder %s22, 1
      %p121 = por %p119, %p120
      %p122 = scmp.ne.s32.totalorder %s114, %s117
      %p123 = scmp.eq.s32.totalorder %s22, 0
      %p124 = por %p122, %p123
      %p125 = scmp.ne.s32.totalorder %s114, %s117
      %p126 = scmp.eq.s32.totalorder %s27, 1
      %p127 = por %p125, %p126
      %p128 = scmp.ne.s32.totalorder %s117, %s118
      %p129 = scmp.eq.s32.totalorder %s27, 0
      %p130 = por %p128, %p129
      %p131 = scmp.ne.s32.totalorder %s117, %s118
      %p132 = scmp.eq.s32.totalorder %s28, 1
      %p133 = por %p131, %p132
      %p135 = scmp.ne.s32.totalorder %s118, %s134
      %p136 = scmp.eq.s32.totalorder %s28, 0
      %p137 = por %p135, %p136
      %s138 = sadd.s32 %s29, %s30
      %p139 = scmp.lt.s32.totalorder %s138, 1
      %s140 = scalar_select %p139, %s138, 1
      %s141 = sadd.s32 %s41, %s37
      %p142 = scmp.lt.s32.totalorder %s141, 1
      %s143 = scalar_select %p142, %s141, 1
      %s144 = ssub.s32 %s140, %s143
      %p145 = scmp.eq.s32.totalorder %s144, 0
      %s147 = sadd.s32 %s146, 1
      %s148 = scalar_select %p145, %s146, %s147
      %p151 = pneg %p145
      %p152 = scmp.eq.s32.totalorder %s22, 1
      %p153 = por %p151, %p152
      %p154 = scmp.ne.s32.totalorder %s146, %s149
      %p155 = scmp.eq.s32.totalorder %s22, 0
      %p156 = por %p154, %p155
      %p157 = scmp.ne.s32.totalorder %s146, %s149
      %p158 = scmp.eq.s32.totalorder %s27, 1
      %p159 = por %p157, %p158
      %p160 = scmp.ne.s32.totalorder %s149, %s150
      %p161 = scmp.eq.s32.totalorder %s27, 0
      %p162 = por %p160, %p161
      %p163 = scmp.ne.s32.totalorder %s149, %s150
      %p164 = scmp.eq.s32.totalorder %s28, 1
      %p165 = por %p163, %p164
      %p167 = scmp.ne.s32.totalorder %s150, %s166
      %p168 = scmp.eq.s32.totalorder %s28, 0
      %p169 = por %p167, %p168
      %s170 = ssub.s32 %s29, %s41
      %p171 = scmp.eq.s32.totalorder %s170, 0
      %s173 = sadd.s32 %s172, 1
      %s174 = scalar_select %p171, %s172, %s173
      %p177 = pneg %p171
      %p178 = scmp.eq.s32.totalorder %s22, 1
      %p179 = por %p177, %p178
      %p180 = scmp.ne.s32.totalorder %s172, %s175
      %p181 = scmp.eq.s32.totalorder %s22, 0
      %p182 = por %p180, %p181
      %p183 = scmp.ne.s32.totalorder %s172, %s175
      %p184 = scmp.eq.s32.totalorder %s27, 1
      %p185 = por %p183, %p184
      %p186 = scmp.ne.s32.totalorder %s175, %s176
      %p187 = scmp.eq.s32.totalorder %s27, 0
      %p188 = por %p186, %p187
      %p189 = scmp.ne.s32.totalorder %s175, %s176
      %p190 = scmp.eq.s32.totalorder %s28, 1
      %p191 = por %p189, %p190
      %p193 = scmp.ne.s32.totalorder %s176, %s192
      %p194 = scmp.eq.s32.totalorder %s28, 0
      %p195 = por %p193, %p194
      %p196 = scmp.le.s32.totalorder 1, %s22
      %p197 = scmp.lt.s32.totalorder %s22, 3
      %p198 = pnand %p196, %p197
      %p199 = pneg %p198
      // Predicated region
      $region9: #{tpu_custom_call.1} parent=5 // pred_check
        _
      $region10: #{tpu_custom_call.1} parent=5 // pred_check_branch
        %201 = sbr.rel (%p198) target = $region12
      $region11: #{tpu_custom_call.1} parent=5 // pred_region
        %s202 = ssub.s32 %s22, 1
      $region12: #{tpu_custom_call.1} parent=5 // pred_fallthru
        _
      %p203 = scmp.lt.s32.totalorder %s22, 2
      // Predicated region
      $region13: #{tpu_custom_call.1} parent=5 // pred_check
        %p204 = pneg %p203
      $region14: #{tpu_custom_call.1} parent=5 // pred_check_branch
        %206 = sbr.rel (%p204) target = $region16
      $region15: #{tpu_custom_call.1} parent=5 // pred_region
        // Predicated region
        $region17: #{tpu_custom_call.1} parent=15 // pred_check
          %p207 = pneg %p60
        $region18: #{tpu_custom_call.1} parent=15 // pred_check_branch
          %209 = sbr.rel (%p207) target = $region20
        $region19: #{tpu_custom_call.1} parent=15 // pred_region
          %s210 = sand.u32 %s50, 1
          %s211 = scalar_lea.sflag [#allocation4], %s210
          %s212 = sand.u32 %s50, 1
          %s213 = smul.addr %s212, 8
          %s214 = scalar_lea.vmem [#allocation3], %s213
          %s215 = sadd.s32 %s29, %s30
          %p216 = scmp.lt.s32.totalorder %s215, 1
          %s217 = scalar_select %p216, %s215, 1
          %s219 = ssub.s32 128, 128
          %220 = vsyncadd %s211, %s219
          %s221 = smul.addr %s217, 128
          %s222 = scalar_lea.hbm %s0, %s221
          %s224 = sshll.u32 %s214, 4
          %s225 = int_to_ptr.vmem [resolvable:$true] %s224
          %227 = dma.hbm_to_vmem [thread:$0]  %s222, 128, %s225, %s211
        $region20: #{tpu_custom_call.1} parent=15 // pred_fallthru
          _
        // Predicated region
        $region21: #{tpu_custom_call.1} parent=15 // pred_check
          %p228 = pneg %p92
        $region22: #{tpu_custom_call.1} parent=15 // pred_check_branch
          %230 = sbr.rel (%p228) target = $region24
        $region23: #{tpu_custom_call.1} parent=15 // pred_region
          %s231 = sand.u32 %s22, 1
          %s232 = scalar_lea.sflag [#allocation7], %s231
          %s233 = sand.u32 %s82, 1
          %s234 = smul.addr %s233, 8
          %s235 = scalar_lea.vmem [#allocation6], %s234
          %s236 = sadd.s32 %s29, %s30
          %p237 = scmp.lt.s32.totalorder %s236, 1
          %s238 = scalar_select %p237, %s236, 1
          %s240 = ssub.s32 128, 128
          %241 = vsyncadd %s232, %s240
          %s242 = smul.addr %s238, 128
          %s243 = scalar_lea.hbm %s1, %s242
          %s245 = sshll.u32 %s235, 4
          %s246 = int_to_ptr.vmem [resolvable:$true] %s245
          %248 = dma.hbm_to_vmem [thread:$0]  %s243, 128, %s246, %s232
        $region24: #{tpu_custom_call.1} parent=15 // pred_fallthru
          _
        // Predicated region
        $region25: #{tpu_custom_call.1} parent=15 // pred_check
          %p249 = pneg %p124
        $region26: #{tpu_custom_call.1} parent=15 // pred_check_branch
          %251 = sbr.rel (%p249) target = $region28
        $region27: #{tpu_custom_call.1} parent=15 // pred_region
          %s252 = sand.u32 %s22, 1
          %s253 = scalar_lea.sflag [#allocation7], %s252
          %s254 = sand.u32 %s114, 1
          %s255 = smul.addr %s254, 8
          %s256 = scalar_lea.vmem [#allocation8], %s255
          %s257 = sadd.s32 %s29, %s30
          %p258 = scmp.lt.s32.totalorder %s257, 1
          %s259 = scalar_select %p258, %s257, 1
          %s261 = ssub.s32 128, 128
          %262 = vsyncadd %s253, %s261
          %s263 = smul.addr %s259, 128
          %s264 = scalar_lea.hbm %s2, %s263
          %s266 = sshll.u32 %s256, 4
          %s267 = int_to_ptr.vmem [resolvable:$true] %s266
          %269 = dma.hbm_to_vmem [thread:$0]  %s264, 128, %s267, %s253
        $region28: #{tpu_custom_call.1} parent=15 // pred_fallthru
          _
        // Predicated region
        $region29: #{tpu_custom_call.1} parent=15 // pred_check
          %p270 = pneg %p156
        $region30: #{tpu_custom_call.1} parent=15 // pred_check_branch
          %272 = sbr.rel (%p270) target = $region32
        $region31: #{tpu_custom_call.1} parent=15 // pred_region
          %s273 = sand.u32 %s146, 1
          %s274 = scalar_lea.sflag [#allocation10], %s273
          %s275 = sand.u32 %s146, 1
          %s276 = smul.addr %s275, 8
          %s277 = scalar_lea.vmem [#allocation9], %s276
          %s278 = sadd.s32 %s29, %s30
          %p279 = scmp.lt.s32.totalorder %s278, 1
          %s280 = scalar_select %p279, %s278, 1
          %s282 = ssub.s32 128, 128
          %283 = vsyncadd %s274, %s282
          %s284 = smul.addr %s280, 128
          %s285 = scalar_lea.hbm %s3, %s284
          %s287 = sshll.u32 %s277, 4
          %s288 = int_to_ptr.vmem [resolvable:$true] %s287
          %290 = dma.hbm_to_vmem [thread:$0]  %s285, 128, %s288, %s274
        $region32: #{tpu_custom_call.1} parent=15 // pred_fallthru
          _
      $region16: #{tpu_custom_call.1} parent=5 // pred_fallthru
        _
      %p291 = scmp.le.s32.totalorder 1, %s22
      %p292 = scmp.lt.s32.totalorder %s22, 3
      %p293 = pnand %p291, %p292
      %p294 = pneg %p293
      // Predicated region
      $region33: #{tpu_custom_call.1} parent=5 // pred_check
        _
      $region34: #{tpu_custom_call.1} parent=5 // pred_check_branch
        %296 = sbr.rel (%p293) target = $region36
      $region35: #{tpu_custom_call.1} parent=5 // pred_region
        %s297 = ssub.s32 %s22, 1
        %s298 = sand.u32 %s53, 1
        %s299 = scalar_lea.sflag [#allocation4], %s298
        %s300 = sand.u32 %s53, 1
        %s301 = smul.addr %s300, 8
        %s302 = scalar_lea.vmem [#allocation3], %s301
        // Predicated region
        $region37: #{tpu_custom_call.1} parent=35 // pred_check
          %p303 = pneg %p66
        $region38: #{tpu_custom_call.1} parent=35 // pred_check_branch
          %305 = sbr.rel (%p303) target = $region40
        $region39: #{tpu_custom_call.1} parent=35 // pred_region
          %306 = dma.done %s299, 128
        $region40: #{tpu_custom_call.1} parent=35 // pred_fallthru
          _
        %s307 = sand.u32 %s27, 1
        %s308 = scalar_lea.sflag [#allocation7], %s307
        %s309 = sand.u32 %s85, 1
        %s310 = smul.addr %s309, 8
        %s311 = scalar_lea.vmem [#allocation6], %s310
        // Predicated region
        $region41: #{tpu_custom_call.1} parent=35 // pred_check
          %p312 = pneg %p98
        $region42: #{tpu_custom_call.1} parent=35 // pred_check_branch
          %314 = sbr.rel (%p312) target = $region44
        $region43: #{tpu_custom_call.1} parent=35 // pred_region
          %315 = dma.done %s308, 128
        $region44: #{tpu_custom_call.1} parent=35 // pred_fallthru
          _
        %s316 = sand.u32 %s27, 1
        %s317 = scalar_lea.sflag [#allocation7], %s316
        %s318 = sand.u32 %s117, 1
        %s319 = smul.addr %s318, 8
        %s320 = scalar_lea.vmem [#allocation8], %s319
        // Predicated region
        $region45: #{tpu_custom_call.1} parent=35 // pred_check
          %p321 = pneg %p130
        $region46: #{tpu_custom_call.1} parent=35 // pred_check_branch
          %323 = sbr.rel (%p321) target = $region48
        $region47: #{tpu_custom_call.1} parent=35 // pred_region
          %324 = dma.done %s317, 128
        $region48: #{tpu_custom_call.1} parent=35 // pred_fallthru
          _
        %s325 = sand.u32 %s149, 1
        %s326 = scalar_lea.sflag [#allocation10], %s325
        %s327 = sand.u32 %s149, 1
        %s328 = smul.addr %s327, 8
        %s329 = scalar_lea.vmem [#allocation9], %s328
        // Predicated region
        $region49: #{tpu_custom_call.1} parent=35 // pred_check
          %p330 = pneg %p162
        $region50: #{tpu_custom_call.1} parent=35 // pred_check_branch
          %332 = sbr.rel (%p330) target = $region52
        $region51: #{tpu_custom_call.1} parent=35 // pred_region
          %333 = dma.done %s326, 128
        $region52: #{tpu_custom_call.1} parent=35 // pred_fallthru
          _
        %s334 = sand.u32 %s53, 1
        %s335 = scalar_lea.sflag [#allocation4], %s334
        %s336 = sand.u32 %s53, 1
        %s337 = smul.addr %s336, 8
        %s338 = scalar_lea.vmem [#allocation3], %s337
        %p339 = pneg %p66
        %p340 = pneg %p63
        %s341 = sand.u32 %s27, 1
        %s342 = scalar_lea.sflag [#allocation7], %s341
        %s343 = sand.u32 %s85, 1
        %s344 = smul.addr %s343, 8
        %s345 = scalar_lea.vmem [#allocation6], %s344
        %p346 = pneg %p98
        %p347 = pneg %p95
        %s348 = sand.u32 %s27, 1
        %s349 = scalar_lea.sflag [#allocation7], %s348
        %s350 = sand.u32 %s117, 1
        %s351 = smul.addr %s350, 8
        %s352 = scalar_lea.vmem [#allocation8], %s351
        %p353 = pneg %p130
        %p354 = pneg %p127
        %s355 = sand.u32 %s149, 1
        %s356 = scalar_lea.sflag [#allocation10], %s355
        %s357 = sand.u32 %s149, 1
        %s358 = smul.addr %s357, 8
        %s359 = scalar_lea.vmem [#allocation9], %s358
        %p360 = pneg %p162
        %p361 = pneg %p159
        %p362 = pneg %p188
        %p363 = pneg %p185
        %s364 = sand.u32 %s175, 1
        %s365 = scalar_lea.sflag [#allocation5], %s364
        %s366 = sand.u32 %s175, 1
        %s367 = smul.addr %s366, 8
        %s368 = scalar_lea.vmem [#allocation11], %s367
        %s369 = sadd.s32 %s31, %s32
        %p370 = scmp.lt.s32.totalorder %s369, 1
        %s371 = scalar_select %p370, %s369, 1
        %s372 = sadd.s32 %s31, %s32
        %p373 = scmp.lt.s32.totalorder %s372, 1
        %s374 = scalar_select %p373, %s372, 1
        %s375 = sadd.s32 %s31, %s32
        %p376 = scmp.lt.s32.totalorder %s375, 1
        %s377 = scalar_select %p376, %s375, 1
        %s378 = sadd.s32 %s31, %s32
        %p379 = scmp.lt.s32.totalorder %s378, 1
        %s380 = scalar_select %p379, %s378, 1
        %p381 = scmp.eq.s32.totalorder %s32, 0
        // Predicated region
        $region53: #{tpu_custom_call.1} parent=35 // pred_check
          %p382 = pneg %p381
        $region54: #{tpu_custom_call.1} parent=35 // pred_check_branch
          %384 = sbr.rel (%p382) target = $region56
        $region55: #{tpu_custom_call.1} parent=35 // pred_region
          %s385 = scalar_lea.smem [#allocation2], 0
          %386 = sst [smem:[%s385]] 0.0
          %s387 = scalar_lea.smem [#allocation2], 1
          %388 = sst [smem:[%s387]] 0.0
          %s389 = scalar_lea.smem [#allocation2], 2
          %390 = sst [smem:[%s389]] 0.0
          %s391 = scalar_lea.smem [#allocation2], 3
          %392 = sst [smem:[%s391]] 0.0
        $region56: #{tpu_custom_call.1} parent=35 // pred_fallthru
          _
        %v393 = vld [vmem:[%s302] sm:$0xff]
        %v394 = vld [vmem:[%s311] sm:$0xff]
        %v395 = vld [vmem:[%s320] sm:$0xff]
        %v396 = vld [vmem:[%s329] sm:$0xff]
        %v397 = vmul.f32 %v393, %v393
        %398 = vadd.xlane.f32.xlu0 %v397
        %v399 = vpop.xlane.xlu0 %398
        %v400 = vmax.f32 %v399, 1e-24
        %v401 = vrsqrt.pop %v400
        %v402 = vmul.f32 %v394, %v394
        %403 = vadd.xlane.f32.xlu0 %v402
        %v404 = vpop.xlane.xlu0 %403
        %v405 = vmax.f32 %v404, 1e-24
        %v406 = vrsqrt.pop %v405
        %v407 = vmul.f32 %v395, %v395
        %408 = vadd.xlane.f32.xlu0 %v407
        %v409 = vpop.xlane.xlu0 %408
        %v410 = vmax.f32 %v409, 1e-24
        %v411 = vrsqrt.pop %v410
        %v412 = vmul.f32 %v396, %v396
        %413 = vadd.xlane.f32.xlu0 %v412
        %v414 = vpop.xlane.xlu0 %413
        %v415 = vmax.f32 %v414, 1e-24
        %v416 = vrsqrt.pop %v415
        %v417 = vmul.f32 %v393, %v396
        %418 = vadd.xlane.f32.xlu0 %v417
        %v419 = vpop.xlane.xlu0 %418
        %v420 = vmul.f32 %v401, %v416
        %v421 = vmul.f32 %v419, %v420
        %v422 = vmul.f32 %v394, %v395
        %423 = vadd.xlane.f32.xlu0 %v422
        %v424 = vpop.xlane.xlu0 %423
        %v425 = vmul.f32 %v406, %v411
        %v426 = vmul.f32 %v424, %v425
        %v427 = vmul.f32 %v393, %v395
        %428 = vadd.xlane.f32.xlu0 %v427
        %v429 = vpop.xlane.xlu0 %428
        %v430 = vmul.f32 %v401, %v411
        %v431 = vmul.f32 %v429, %v430
        %v432 = vmul.f32 %v394, %v396
        %433 = vadd.xlane.f32.xlu0 %v432
        %v434 = vpop.xlane.xlu0 %433
        %v435 = vmul.f32 %v406, %v416
        %v436 = vmul.f32 %v434, %v435
        %s437 = sadd.s32 %s31, %s32
        %s438 = smul.u32 %s437, 8
        %v439 = vlaneseq
        %v440 = vshrl.u32 %v439, 7
        %v441 = vstv %s438
        %v442 = vadd.s32 %v441, %v440
        %vm443 = vcmp.lt.s32.totalorder %v442, 12
        %v444 = vsel %vm443, %v421, 0.0
        %v445 = vsel %vm443, %v426, 0.0
        %v446 = vsel %vm443, %v431, 0.0
        %v447 = vsel %vm443, %v436, 0.0
        %s448 = sld [smem:[#allocation2]]
        %vm449 = vcmask 7168
        %v450 = vsel %vm449, %v444, 0.0
        %451 = vadd.xlane.f32.xlu0 %v450
        %v452 = vpop.xlane.xlu0 %451
        %v453 = vrot.slane %v452, 4
        %v454 = vadd.f32 %v452, %v453
        %v455 = vrot.slane %v454, 2
        %v456 = vadd.f32 %v454, %v455
        %v457 = vrot.slane %v456, 1
        %v458 = vadd.f32 %v456, %v457
        %s459 = vtos %v458
        %s460 = sadd.f32 %s448, %s459
        %s461 = scalar_lea.smem [#allocation2], 0
        %462 = sst [smem:[%s461]] %s460
        %s463 = sld [smem:[#allocation2 + $0x1]]
        %v464 = vsel %vm449, %v445, 0.0
        %465 = vadd.xlane.f32.xlu0 %v464
        %v466 = vpop.xlane.xlu0 %465
        %v467 = vrot.slane %v466, 4
        %v468 = vadd.f32 %v466, %v467
        %v469 = vrot.slane %v468, 2
        %v470 = vadd.f32 %v468, %v469
        %v471 = vrot.slane %v470, 1
        %v472 = vadd.f32 %v470, %v471
        %s473 = vtos %v472
        %s474 = sadd.f32 %s463, %s473
        %s475 = scalar_lea.smem [#allocation2], 1
        %476 = sst [smem:[%s475]] %s474
        %s477 = sld [smem:[#allocation2 + $0x2]]
        %v478 = vsel %vm449, %v446, 0.0
        %479 = vadd.xlane.f32.xlu0 %v478
        %v480 = vpop.xlane.xlu0 %479
        %v481 = vrot.slane %v480, 4
        %v482 = vadd.f32 %v480, %v481
        %v483 = vrot.slane %v482, 2
        %v484 = vadd.f32 %v482, %v483
        %v485 = vrot.slane %v484, 1
        %v486 = vadd.f32 %v484, %v485
        %s487 = vtos %v486
        %s488 = sadd.f32 %s477, %s487
        %s489 = scalar_lea.smem [#allocation2], 2
        %490 = sst [smem:[%s489]] %s488
        %s491 = sld [smem:[#allocation2 + $0x3]]
        %v492 = vsel %vm449, %v447, 0.0
        %493 = vadd.xlane.f32.xlu0 %v492
        %v494 = vpop.xlane.xlu0 %493
        %v495 = vrot.slane %v494, 4
        %v496 = vadd.f32 %v494, %v495
        %v497 = vrot.slane %v496, 2
        %v498 = vadd.f32 %v496, %v497
        %v499 = vrot.slane %v498, 1
        %v500 = vadd.f32 %v498, %v499
        %s501 = vtos %v500
        %s502 = sadd.f32 %s491, %s501
        %s503 = scalar_lea.smem [#allocation2], 3
        %504 = sst [smem:[%s503]] %s502
        // Predicated region
        $region57: #{tpu_custom_call.1} parent=35 // pred_check
          %p505 = pneg %p381
        $region58: #{tpu_custom_call.1} parent=35 // pred_check_branch
          %507 = sbr.rel (%p505) target = $region60
        $region59: #{tpu_custom_call.1} parent=35 // pred_region
          %v508 = vlaneseq
          %v509 = vand.u32 %v508, 127
          %vm510 = vcmp.eq.s32.totalorder %v440, 0
          %vm511 = vcmp.eq.s32.totalorder %v509, 0
          %vm512 = vmand %vm510, %vm511
          %s513 = sld [smem:[#allocation2]]
          %v514 = vstv %s513
          %v515 = vsel %vm512, %v514, 0.0
          %vm516 = vcmp.eq.s32.totalorder %v509, 1
          %vm517 = vmand %vm510, %vm516
          %s518 = sld [smem:[#allocation2 + $0x1]]
          %v519 = vstv %s518
          %v520 = vsel %vm517, %v519, 0.0
          %v521 = vadd.f32 %v515, %v520
          %vm522 = vcmp.eq.s32.totalorder %v509, 2
          %vm523 = vmand %vm510, %vm522
          %s524 = sld [smem:[#allocation2 + $0x2]]
          %v525 = vstv %s524
          %v526 = vsel %vm523, %v525, 0.0
          %v527 = vadd.f32 %v521, %v526
          %vm528 = vcmp.eq.s32.totalorder %v509, 3
          %vm529 = vmand %vm510, %vm528
          %s530 = sld [smem:[#allocation2 + $0x3]]
          %v531 = vstv %s530
          %v532 = vsel %vm529, %v531, 0.0
          %v533 = vadd.f32 %v527, %v532
          %534 = vst [vmem:[%s368] sm:$0xff] %v533
        $region60: #{tpu_custom_call.1} parent=35 // pred_fallthru
          _
        %s535 = sand.u32 %s175, 1
        %s536 = scalar_lea.sflag [#allocation5], %s535
        %s537 = sand.u32 %s175, 1
        %s538 = smul.addr %s537, 8
        %s539 = scalar_lea.vmem [#allocation11], %s538
        // Predicated region
        $region61: #{tpu_custom_call.1} parent=35 // pred_check
          %p540 = pneg %p185
        $region62: #{tpu_custom_call.1} parent=35 // pred_check_branch
          %542 = sbr.rel (%p540) target = $region64
        $region63: #{tpu_custom_call.1} parent=35 // pred_region
          %s544 = ssub.s32 128, 128
          %545 = vsyncadd %s536, %s544
          %s546 = smul.addr %s31, 128
          %s547 = scalar_lea.hbm %s4, %s546
          %s549 = sshll.u32 %s539, 4
          %s550 = int_to_ptr.vmem [resolvable:$true] %s549
          %552 = dma.vmem_to_hbm [thread:$0]  %s550, 128, %s547, %s536
        $region64: #{tpu_custom_call.1} parent=35 // pred_fallthru
          _
      $region36: #{tpu_custom_call.1} parent=5 // pred_fallthru
        _
      %p553 = scmp.le.s32.totalorder 2, %s22
      // Predicated region
      $region65: #{tpu_custom_call.1} parent=5 // pred_check
        %p554 = pneg %p553
      $region66: #{tpu_custom_call.1} parent=5 // pred_check_branch
        %556 = sbr.rel (%p554) target = $region68
      $region67: #{tpu_custom_call.1} parent=5 // pred_region
        %s557 = ssub.s32 %s22, 2
        // Predicated region
        $region69: #{tpu_custom_call.1} parent=67 // pred_check
          %p558 = pneg %p191
        $region70: #{tpu_custom_call.1} parent=67 // pred_check_branch
          %560 = sbr.rel (%p558) target = $region72
        $region71: #{tpu_custom_call.1} parent=67 // pred_region
          %s561 = sand.u32 %s176, 1
          %s562 = scalar_lea.sflag [#allocation5], %s561
          %s563 = sand.u32 %s176, 1
          %s564 = smul.addr %s563, 8
          %s565 = scalar_lea.vmem [#allocation11], %s564
          %566 = dma.done %s562, 128
        $region72: #{tpu_custom_call.1} parent=67 // pred_fallthru
          _
      $region68: #{tpu_custom_call.1} parent=5 // pred_fallthru
        _
    $region6: #{tpu_custom_call.1} parent=1 // loop_footer
      %s26 = sadd.s32 1, %s22
    $region7: #{tpu_custom_call.1} parent=1 // loop_footer_branch
      %21 = sbr.rel target = $region3
    $region8: #{tpu_custom_call.1} parent=1 // loop_exit
      _
    %567 = vsyncpa [#allocation4], 1
    %s568 = scalar_lea.sflag [#allocation4], 1
    %569 = vsyncpa %s568, 1
    %570 = vsyncpa [#allocation7], 1
    %s571 = scalar_lea.sflag [#allocation7], 1
    %572 = vsyncpa %s571, 1
    %573 = vsyncpa [#allocation10], 1
    %s574 = scalar_lea.sflag [#allocation10], 1
    %575 = vsyncpa %s574, 1
    %576 = vsyncpa [#allocation5], 1
    %s577 = scalar_lea.sflag [#allocation5], 1
    %578 = vsyncpa %s577, 1

</llo_original>
